<compile_context>
chip_gen: v5e
topology: v5e:2x2
jax: 0.10.0
libtpu: 0.0.40
codegen_flags: <defaults>
</compile_context>

<pallas_src>
import functools
import math

import jax
import jax.numpy as jnp
from jax.experimental import pallas as pl
from jax.experimental.pallas import tpu as pltpu


# ------------------------------ helpers ------------------------------------ #

def _round_up(x, m):
    return ((x + m - 1) // m) * m


def _choose_tile(n, preferred, align):
    """Largest multiple of `align` <= `preferred` that divides n, relaxing the
    alignment (256 -> 128 -> ... -> 8) before falling back to the full dimension
    (a full-extent block always satisfies the BlockSpec divisibility rule)."""
    if n <= preferred:
        return n
    a = align
    while a >= 8:
        t = (preferred // a) * a
        while t >= a:
            if n % t == 0:
                return t
            t -= a
        a //= 2
    return n


def _vmem_limit_bytes():
    # Explicit VMEM budget: well above the 16/32 MiB scoped defaults, safely below
    # v7x's 64 MiB physical VMEM.  Use 3/4 of physical capacity when queryable.
    try:
        cap = pltpu.get_tpu_info().vmem_capacity_bytes
        return int(min(96 * 1024 * 1024, cap * 3 // 4))
    except Exception:
        return 48 * 1024 * 1024


_VMEM_LIMIT = _vmem_limit_bytes()


# ----------------------------- tiled GEMM kernel ---------------------------- #

def _matmul_kernel(x_ref, w_ref, o_ref, acc_ref):
    @pl.when(pl.program_id(2) == 0)
    def _():
        acc_ref[...] = jnp.zeros_like(acc_ref)

    acc_ref[...] += jnp.dot(
        x_ref[...], w_ref[...], preferred_element_type=jnp.float32
    )

    @pl.when(pl.program_id(2) == pl.num_programs(2) - 1)
    def _():
        o_ref[...] = acc_ref[...].astype(o_ref.dtype)


def pallas_matmul(x, w, out_dtype=None, tm=512, tn=1024, tk=1024):
    """x: (M, K), w: (K, N) -> (M, N). Grid-tiled, f32 accumulation in VMEM."""
    M, K = x.shape
    K2, N = w.shape
    assert K == K2
    out_dtype = out_dtype if out_dtype is not None else x.dtype
    bm = _choose_tile(M, tm, 16)     # bf16 sublane packing = 16
    bn = _choose_tile(N, tn, 256)    # 256-wide MXU on v6e/v7x
    bk = _choose_tile(K, tk, 256)
    grid = (M // bm, N // bn, K // bk)
    return pl.pallas_call(
        _matmul_kernel,
        out_shape=jax.ShapeDtypeStruct((M, N), out_dtype),
        grid_spec=pltpu.PrefetchScalarGridSpec(
            num_scalar_prefetch=0,
            grid=grid,
            in_specs=[
                pl.BlockSpec((bm, bk), lambda i, j, k: (i, k)),
                pl.BlockSpec((bk, bn), lambda i, j, k: (k, j)),
            ],
            out_specs=pl.BlockSpec((bm, bn), lambda i, j, k: (i, j)),
            scratch_shapes=[pltpu.VMEM((bm, bn), jnp.float32)],
        ),
        compiler_params=pltpu.CompilerParams(
            dimension_semantics=("parallel", "parallel", "arbitrary"),
            vmem_limit_bytes=_VMEM_LIMIT,
        ),
    )(x, w)


# --------------------- GQA flash-attention kernel --------------------------- #

def _attn_kernel(sc_ref, q_ref, k_ref, v_ref, o_ref,
                 qs_sc, m_sc, l_sc, acc_sc, *, scale, bt):
    # sc_ref (SMEM): [0] = live KV length T, [1] = last live KV-block index.
    # q_ref/o_ref: (1, 1, bq, D)   one row-block of the folded GQA group (n_rep*S rows)
    # k_ref/v_ref: (1, 1, bt, D)   one KV block of the flash loop (clamped past T)
    t = pl.program_id(3)
    t_len = sc_ref[0]
    block_start = t * bt

    @pl.when(t == 0)
    def _():
        # Pre-scale q once per (b, h, row-block): saves a VPU pass over the
        # (bq, bt) score tile on every KV step.
        qs_sc[...] = (q_ref[0, 0].astype(jnp.float32) * scale).astype(qs_sc.dtype)
        m_sc[...] = jnp.full_like(m_sc, -jnp.inf)
        l_sc[...] = jnp.zeros_like(l_sc)
        acc_sc[...] = jnp.zeros_like(acc_sc)

    @pl.when(block_start < t_len)      # skip KV blocks beyond the live length
    def _():
        q = qs_sc[...]                 # (bq, D), pre-scaled, bf16
        k = k_ref[0, 0]                # (bt, D), bf16
        v = v_ref[0, 0]                # (bt, D), bf16

        # scores = q_scaled @ k^T, contracting on D without materializing k.T
        s = jax.lax.dot_general(
            q, k, dimension_numbers=(((1,), (1,)), ((), ())),
            preferred_element_type=jnp.float32,
        )                              # (bq, bt), f32

        # mask out positions >= T in the (partially) live tail block
        kv_pos = block_start + jax.lax.broadcasted_iota(jnp.int32, s.shape, 1)
        s = jnp.where(kv_pos < t_len, s, -jnp.inf)

        m_prev = m_sc[...]
        m_new = jnp.maximum(m_prev, jnp.max(s, axis=-1, keepdims=True))
        alpha = jnp.exp(m_prev - m_new)
        p = jnp.exp(s - m_new)         # f32
        l_sc[...] = alpha * l_sc[...] + jnp.sum(p, axis=-1, keepdims=True)
        acc_sc[...] = alpha * acc_sc[...] + jnp.dot(
            p.astype(v.dtype), v, preferred_element_type=jnp.float32
        )
        m_sc[...] = m_new

    @pl.when(t == pl.num_programs(3) - 1)
    def _():
        inv_l = pl.reciprocal(l_sc[...], approx=True)
        o_ref[0, 0] = (acc_sc[...] * inv_l).astype(o_ref.dtype)


def pallas_attention(q, k_cache, v_cache, t_len, *, kv_block=512, q_block=256):
    """q: (B, Hkv, rows, D) with rows = n_rep*S (GQA group folded into rows);
    k_cache, v_cache: (Bmax, Hkv, T_alloc, D) — the full cache, read up to t_len.
    Returns (B, Hkv, rows, D)."""
    B, Hkv, rows, D = q.shape
    _, _, T_alloc, _ = k_cache.shape
    scale = 1.0 / math.sqrt(D)

    bt = min(kv_block, T_alloc)
    assert T_alloc % bt == 0, "cache length must be padded to a multiple of kv_block"
    bq = _choose_tile(rows, q_block, 16)
    n_kv_blocks = T_alloc // bt
    grid = (B, Hkv, rows // bq, n_kv_blocks)

    # scalar prefetch: [live length T, last live block index]
    last_blk = (t_len + bt - 1) // bt - 1
    scalars = jnp.stack([t_len, last_blk]).astype(jnp.int32)

    # index_maps receive the scalar-prefetch ref positionally; KV block index is
    # clamped to the last live block so dead iterations issue no new DMA.
    q_map = lambda b, h, r, t, sc: (b, h, r, 0)
    kv_map = lambda b, h, r, t, sc: (b, h, jnp.minimum(t, sc[1]), 0)
    # TODO(synk): optionally pipeline_mode=pl.Buffered(3) on K/V specs for decode.

    return pl.pallas_call(
        functools.partial(_attn_kernel, scale=scale, bt=bt),
        out_shape=jax.ShapeDtypeStruct((B, Hkv, rows, D), q.dtype),
        grid_spec=pltpu.PrefetchScalarGridSpec(
            num_scalar_prefetch=1,
            grid=grid,
            in_specs=[
                pl.BlockSpec((1, 1, bq, D), q_map),
                pl.BlockSpec((1, 1, bt, D), kv_map),
                pl.BlockSpec((1, 1, bt, D), kv_map),
            ],
            out_specs=pl.BlockSpec((1, 1, bq, D), q_map),
            scratch_shapes=[
                pltpu.VMEM((bq, D), q.dtype),       # pre-scaled q
                pltpu.VMEM((bq, 1), jnp.float32),   # running max m
                pltpu.VMEM((bq, 1), jnp.float32),   # running denom l
                pltpu.VMEM((bq, D), jnp.float32),   # output accumulator
            ],
        ),
        compiler_params=pltpu.CompilerParams(
            dimension_semantics=("parallel", "parallel", "parallel", "arbitrary"),
            vmem_limit_bytes=_VMEM_LIMIT,
        ),
    )(scalars, q, k_cache, v_cache)


# ------------------------------- JAX glue ----------------------------------- #

def apply_rotary(x, cos, sin):
    """x: (B, S, H, D); cos/sin: (S, D//2). Complex rotation on adjacent pairs,
    matching torch.view_as_complex on (..., -1, 2)."""
    B, S, H, D = x.shape
    xr = x.astype(jnp.float32).reshape(B, S, H, D // 2, 2)
    xa, xb = xr[..., 0], xr[..., 1]
    c = cos[None, :, None, :]
    s = sin[None, :, None, :]
    ra = xa * c - xb * s
    rb = xa * s + xb * c
    return jnp.stack([ra, rb], axis=-1).reshape(B, S, H, D).astype(x.dtype)


@functools.partial(
    jax.jit,
    static_argnames=("n_heads_q", "n_kv_heads", "head_dim", "kv_block"),
    donate_argnums=(3, 4),     # KV caches updated in place (no full-cache copy)
)
def _attention_forward(x, w_qkv, wo_t, cache_k, cache_v, freqs_cos, freqs_sin,
                       start_pos, *, n_heads_q, n_kv_heads, head_dim, kv_block):
    B, S, dim = x.shape
    n_rep = n_heads_q // n_kv_heads
    q_out = n_heads_q * head_dim
    kv_out = n_kv_heads * head_dim

    # --- fused QKV projection (single tiled bf16 GEMM, activations read once) ---
    x2 = x.reshape(B * S, dim).astype(w_qkv.dtype)
    qkv = pallas_matmul(x2, w_qkv, out_dtype=w_qkv.dtype)   # (B*S, q_out + 2*kv_out)
    xq = qkv[:, :q_out].reshape(B, S, n_heads_q, head_dim)
    xk = qkv[:, q_out:q_out + kv_out].reshape(B, S, n_kv_heads, head_dim)
    xv = qkv[:, q_out + kv_out:].reshape(B, S, n_kv_heads, head_dim)

    # --- rotary embedding (f32 math, tiny elementwise, fused by XLA) ---
    xq = apply_rotary(xq, freqs_cos, freqs_sin)
    xk = apply_rotary(xk, freqs_cos, freqs_sin)

    # --- KV cache update: cache is (Bmax, Hkv, Tmax, D); only the S new tokens
    #     are transposed/written; buffers are donated so this is in place. ---
    xk_t = jnp.transpose(xk, (0, 2, 1, 3)).astype(cache_k.dtype)   # (B, Hkv, S, D)
    xv_t = jnp.transpose(xv, (0, 2, 1, 3)).astype(cache_v.dtype)
    cache_k = jax.lax.dynamic_update_slice(cache_k, xk_t, (0, 0, start_pos, 0))
    cache_v = jax.lax.dynamic_update_slice(cache_v, xv_t, (0, 0, start_pos, 0))
    t_len = start_pos + S                                           # dynamic live length

    # --- GQA group folded into the row dim: (B, Hkv, n_rep*S, D) ---
    q = jnp.transpose(xq, (0, 2, 1, 3)).reshape(B, n_kv_heads, n_rep * S, head_dim)

    out = pallas_attention(q, cache_k, cache_v, t_len, kv_block=kv_block)
    out = out.reshape(B, n_heads_q, S, head_dim)
    out = jnp.transpose(out, (0, 2, 1, 3)).reshape(B * S, n_heads_q * head_dim)

    # --- output projection, result back in f32 like the module's input ---
    y = pallas_matmul(out.astype(wo_t.dtype), wo_t, out_dtype=jnp.float32)
    return y.reshape(B, S, dim), cache_k, cache_v


class SelfAttentionPallas:
    def __init__(self, dim, n_heads, n_kv_heads, max_batch_size, max_seq_len, key,
                 compute_dtype=jnp.bfloat16, kv_block=512):
        self.dim = dim
        self.n_heads_q = n_heads
        self.n_kv_heads = n_kv_heads
        self.n_rep = n_heads // n_kv_heads
        self.head_dim = dim // n_heads
        self.kv_block = int(kv_block)
        k1, k2, k3, k4 = jax.random.split(key, 4)
        # f32 master weights, nn.Linear layout (out, in) — used by the pure-JAX reference
        self.wq = 0.02 * jax.random.normal(k1, (n_heads * self.head_dim, dim), jnp.float32)
        self.wk = 0.02 * jax.random.normal(k2, (n_kv_heads * self.head_dim, dim), jnp.float32)
        self.wv = 0.02 * jax.random.normal(k3, (n_kv_heads * self.head_dim, dim), jnp.float32)
        self.wo = 0.02 * jax.random.normal(k4, (dim, n_heads * self.head_dim), jnp.float32)
        # Kernel weights: pre-transposed to (in, out), QKV fused, bf16 for MXU throughput
        self.w_qkv = jnp.concatenate(
            [self.wq.T, self.wk.T, self.wv.T], axis=1).astype(compute_dtype)
        self.wo_t = self.wo.T.astype(compute_dtype)
        # KV cache in attention-native layout (Bmax, Hkv, Tmax_padded, D), bf16.
        bt = min(self.kv_block, _round_up(max_seq_len, 16))
        self.cache_len = _round_up(max_seq_len, bt)
        self.cache_k = jnp.zeros(
            (max_batch_size, n_kv_heads, self.cache_len, self.head_dim), compute_dtype)
        self.cache_v = jnp.zeros(
            (max_batch_size, n_kv_heads, self.cache_len, self.head_dim), compute_dtype)

    def forward(self, x, start_pos, freqs_cos, freqs_sin):
        out, self.cache_k, self.cache_v = _attention_forward(
            x, self.w_qkv, self.wo_t, self.cache_k, self.cache_v,
            freqs_cos, freqs_sin, jnp.asarray(start_pos, jnp.int32),
            n_heads_q=self.n_heads_q, n_kv_heads=self.n_kv_heads,
            head_dim=self.head_dim, kv_block=self.kv_block)
        return out

    # pure-JAX f32 reference (same math, no Pallas) for validation
    def forward_ref(self, x, start_pos, freqs_cos, freqs_sin, cache_k0, cache_v0):
        B, S, dim = x.shape
        xq = (x @ self.wq.T).reshape(B, S, self.n_heads_q, self.head_dim)
        xk = (x @ self.wk.T).reshape(B, S, self.n_kv_heads, self.head_dim)
        xv = (x @ self.wv.T).reshape(B, S, self.n_kv_heads, self.head_dim)
        xq = apply_rotary(xq, freqs_cos, freqs_sin)
        xk = apply_rotary(xk, freqs_cos, freqs_sin)
        ck = jax.lax.dynamic_update_slice(cache_k0, xk, (0, start_pos, 0, 0))
        cv = jax.lax.dynamic_update_slice(cache_v0, xv, (0, start_pos, 0, 0))
        keys = ck[:B, : start_pos + S]
        values = cv[:B, : start_pos + S]
        keys = jnp.repeat(keys, self.n_rep, axis=2)
        values = jnp.repeat(values, self.n_rep, axis=2)
        q = jnp.transpose(xq, (0, 2, 1, 3))
        k = jnp.transpose(keys, (0, 2, 1, 3))
        v = jnp.transpose(values, (0, 2, 1, 3))
        scores = jnp.einsum("bhsd,bhtd->bhst", q, k) / math.sqrt(self.head_dim)
        scores = jax.nn.softmax(scores.astype(jnp.float32), axis=-1).astype(q.dtype)
        out = jnp.einsum("bhst,bhtd->bhsd", scores, v)
        out = jnp.transpose(out, (0, 2, 1, 3)).reshape(B, S, -1)
        return out @ self.wo.T


if __name__ == "__main__":
    # Small ModelArgs-consistent shapes
    dim = 32
    n_heads = 4
    n_kv_heads = 2
    head_dim = dim // n_heads          # 8
    max_batch_size = 2
    max_seq_len = 16
    batch, seq_len = 2, 8
    start_pos = 4                      # exercise cache prefix (zeros before start_pos)

    root = jax.random.PRNGKey(0)
    k_param, k_x = jax.random.split(root)

    attn = SelfAttentionPallas(dim, n_heads, n_kv_heads, max_batch_size, max_seq_len, k_param)

    x = jax.random.normal(k_x, (batch, seq_len, dim), jnp.float32)

    # rotary frequencies for positions [start_pos, start_pos + seq_len)
    theta = 10000.0 ** (-jnp.arange(0, head_dim, 2, dtype=jnp.float32) / head_dim)  # (D/2,)
    positions = jnp.arange(start_pos, start_pos + seq_len, dtype=jnp.float32)
    angles = positions[:, None] * theta[None, :]                                    # (S, D/2)
    freqs_cos, freqs_sin = jnp.cos(angles), jnp.sin(angles)

    out = attn.forward(x, start_pos, freqs_cos, freqs_sin)
    out = jax.block_until_ready(out)

    # f32 reference with fresh f32 caches (same initial zero state), PyTorch layout
    cache_k0 = jnp.zeros((max_batch_size, max_seq_len, n_kv_heads, head_dim), jnp.float32)
    cache_v0 = jnp.zeros((max_batch_size, max_seq_len, n_kv_heads, head_dim), jnp.float32)
    ref = attn.forward_ref(x, start_pos, freqs_cos, freqs_sin, cache_k0, cache_v0)

    assert out.shape == (batch, seq_len, dim)
    # bf16 MXU path vs f32 reference: allow bf16-level error
    max_err = float(jnp.max(jnp.abs(out - ref)))
    assert max_err < 2e-2, f"Pallas output mismatch vs reference (max err {max_err})"

    print("KERNEL_OK")
</pallas_src>

<mosaic_0001>
module attributes {stable_mosaic.version = 11 : i64} {
  func.func @_matmul_kernel(%arg0: i32, %arg1: i32, %arg2: i32, %arg3: memref<16x32xbf16, #tpu.memory_space<vmem>>, %arg4: memref<32x64xbf16, #tpu.memory_space<vmem>>, %arg5: memref<16x64xbf16, #tpu.memory_space<vmem>>, %arg6: memref<16x64xf32, #tpu.memory_space<vmem>>) attributes {dimension_semantics = [#tpu.dimension_semantics<parallel>, #tpu.dimension_semantics<parallel>, #tpu.dimension_semantics<arbitrary>], iteration_bounds = array<i64: 1, 1, 1>, scalar_prefetch = 0 : i64, scratch_operands = 1 : i64, tpu.core_type = #tpu.core_type<tc>, window_params = [{transform_indices = @transform_0, window_bounds = array<i64: 16, 32>}, {transform_indices = @transform_1, window_bounds = array<i64: 32, 64>}, {transform_indices = @transform_2, window_bounds = array<i64: 16, 64>}]} {
    %c0_i32 = arith.constant 0 : i32
    %0 = arith.cmpi eq, %arg2, %c0_i32 : i32
    %1 = arith.extui %0 : i1 to i32
    %c0_i32_0 = arith.constant 0 : i32
    %2 = arith.cmpi ne, %1, %c0_i32_0 : i32
    scf.if %2 {
      %cst_10 = arith.constant 0.000000e+00 : f32
      %12 = vector.broadcast %cst_10 : f32 to vector<16x64xf32>
      %c0_11 = arith.constant 0 : index
      %c0_12 = arith.constant 0 : index
      %13 = vector.load %arg6[%c0_11, %c0_12] : memref<16x64xf32, #tpu.memory_space<vmem>>, vector<16x64xf32>
      tpu.vector_store %arg6[%c0_11, %c0_12], %12 {strides = array<i32>} : memref<16x64xf32, #tpu.memory_space<vmem>>, vector<16x64xf32>,
    } else {
    }
    %c0 = arith.constant 0 : index
    %c0_1 = arith.constant 0 : index
    %3 = vector.load %arg6[%c0, %c0_1] : memref<16x64xf32, #tpu.memory_space<vmem>>, vector<16x64xf32>
    %c0_2 = arith.constant 0 : index
    %c0_3 = arith.constant 0 : index
    %4 = vector.load %arg3[%c0_2, %c0_3] : memref<16x32xbf16, #tpu.memory_space<vmem>>, vector<16x32xbf16>
    %c0_4 = arith.constant 0 : index
    %c0_5 = arith.constant 0 : index
    %5 = vector.load %arg4[%c0_4, %c0_5] : memref<32x64xbf16, #tpu.memory_space<vmem>>, vector<32x64xbf16>
    %cst = arith.constant dense<0.000000e+00> : vector<16x64xf32>
    %6 = tpu.matmul %4, %5, %cst {dimension_numbers = #tpu.dot_dimension_numbers<[1], [0], [0], [1], [0, 0, 1, 1], [], []>} : vector<16x32xbf16>, vector<32x64xbf16>, vector<16x64xf32> -> vector<16x64xf32>
    %7 = arith.addf %3, %6 : vector<16x64xf32>
    %c0_6 = arith.constant 0 : index
    %c0_7 = arith.constant 0 : index
    %8 = vector.load %arg6[%c0_6, %c0_7] : memref<16x64xf32, #tpu.memory_space<vmem>>, vector<16x64xf32>
    tpu.vector_store %arg6[%c0_6, %c0_7], %7 {strides = array<i32>} : memref<16x64xf32, #tpu.memory_space<vmem>>, vector<16x64xf32>,
    %c0_i32_8 = arith.constant 0 : i32
    %9 = arith.cmpi eq, %arg2, %c0_i32_8 : i32
    %10 = arith.extui %9 : i1 to i32
    %c0_i32_9 = arith.constant 0 : i32
    %11 = arith.cmpi ne, %10, %c0_i32_9 : i32
    scf.if %11 {
      %c0_10 = arith.constant 0 : index
      %c0_11 = arith.constant 0 : index
      %12 = vector.load %arg6[%c0_10, %c0_11] : memref<16x64xf32, #tpu.memory_space<vmem>>, vector<16x64xf32>
      %13 = arith.truncf %12 : vector<16x64xf32> to vector<16x64xbf16>
      %c0_12 = arith.constant 0 : index
      %c0_13 = arith.constant 0 : index
      %14 = vector.load %arg5[%c0_12, %c0_13] : memref<16x64xbf16, #tpu.memory_space<vmem>>, vector<16x64xbf16>
      tpu.vector_store %arg5[%c0_12, %c0_13], %13 {strides = array<i32>} : memref<16x64xbf16, #tpu.memory_space<vmem>>, vector<16x64xbf16>,
    } else {
    }
    return
  }
  func.func @transform_0(%arg0: i32, %arg1: i32, %arg2: i32) -> (i32, i32) {
    %c0_i32 = arith.constant 0 : i32
    return %arg0, %arg2 : i32, i32
  }
  func.func @transform_1(%arg0: i32, %arg1: i32, %arg2: i32) -> (i32, i32) {
    %c0_i32 = arith.constant 0 : i32
    return %arg2, %arg1 : i32, i32
  }
  func.func @transform_2(%arg0: i32, %arg1: i32, %arg2: i32) -> (i32, i32) {
    %c0_i32 = arith.constant 0 : i32
    return %arg0, %arg1 : i32, i32
  }
}

module attributes {stable_mosaic.version = 11 : i64} {
  func.func @_attn_kernel(%arg0: i32, %arg1: i32, %arg2: i32, %arg3: i32, %arg4: memref<2xi32, #tpu.memory_space<smem>>, %arg5: memref<1x1x16x8xbf16, #tpu.memory_space<vmem>>, %arg6: memref<1x1x16x8xbf16, #tpu.memory_space<vmem>>, %arg7: memref<1x1x16x8xbf16, #tpu.memory_space<vmem>>, %arg8: memref<1x1x16x8xbf16, #tpu.memory_space<vmem>>, %arg9: memref<16x8xbf16, #tpu.memory_space<vmem>>, %arg10: memref<16x1xf32, #tpu.memory_space<vmem>>, %arg11: memref<16x1xf32, #tpu.memory_space<vmem>>, %arg12: memref<16x8xf32, #tpu.memory_space<vmem>>) attributes {dimension_semantics = [#tpu.dimension_semantics<parallel>, #tpu.dimension_semantics<parallel>, #tpu.dimension_semantics<parallel>, #tpu.dimension_semantics<arbitrary>], iteration_bounds = array<i64: 2, 2, 1, 1>, scalar_prefetch = 1 : i64, scratch_operands = 4 : i64, tpu.core_type = #tpu.core_type<tc>, window_params = [{transform_indices = @transform_0, window_bounds = array<i64: 1, 1, 16, 8>}, {transform_indices = @transform_1, window_bounds = array<i64: 1, 1, 16, 8>}, {transform_indices = @transform_2, window_bounds = array<i64: 1, 1, 16, 8>}, {transform_indices = @transform_3, window_bounds = array<i64: 1, 1, 16, 8>}]} {
    %c0 = arith.constant 0 : index
    %0 = memref.load %arg4[%c0] : memref<2xi32, #tpu.memory_space<smem>>
    %c16_i32 = arith.constant 16 : i32
    %1 = arith.muli %arg3, %c16_i32 : i32
    %c0_i32 = arith.constant 0 : i32
    %2 = arith.cmpi eq, %arg3, %c0_i32 : i32
    %3 = arith.extui %2 : i1 to i32
    %c0_i32_0 = arith.constant 0 : i32
    %4 = arith.cmpi ne, %3, %c0_i32_0 : i32
    scf.if %4 {
      %c0_4 = arith.constant 0 : index
      %c0_5 = arith.constant 0 : index
      %c0_6 = arith.constant 0 : index
      %c0_7 = arith.constant 0 : index
      %11 = vector.load %arg5[%c0_4, %c0_5, %c0_6, %c0_7] : memref<1x1x16x8xbf16, #tpu.memory_space<vmem>>, vector<1x1x16x8xbf16>
      %12 = vector.shape_cast %11 : vector<1x1x16x8xbf16> to vector<16x8xbf16>
      %13 = arith.extf %12 : vector<16x8xbf16> to vector<16x8xf32>
      %cst = arith.constant 0.353553385 : f32
      %14 = vector.broadcast %cst : f32 to vector<16x8xf32>
      %15 = arith.mulf %13, %14 : vector<16x8xf32>
      %16 = arith.truncf %15 : vector<16x8xf32> to vector<16x8xbf16>
      %c0_8 = arith.constant 0 : index
      %c0_9 = arith.constant 0 : index
      %17 = vector.load %arg9[%c0_8, %c0_9] : memref<16x8xbf16, #tpu.memory_space<vmem>>, vector<16x8xbf16>
      tpu.vector_store %arg9[%c0_8, %c0_9], %16 {strides = array<i32>} : memref<16x8xbf16, #tpu.memory_space<vmem>>, vector<16x8xbf16>,
      %cst_10 = arith.constant 0xFF800000 : f32
      %18 = vector.broadcast %cst_10 : f32 to vector<16x1xf32>
      %c0_11 = arith.constant 0 : index
      %c0_12 = arith.constant 0 : index
      %19 = vector.load %arg10[%c0_11, %c0_12] : memref<16x1xf32, #tpu.memory_space<vmem>>, vector<16x1xf32>
      tpu.vector_store %arg10[%c0_11, %c0_12], %18 {strides = array<i32>} : memref<16x1xf32, #tpu.memory_space<vmem>>, vector<16x1xf32>,
      %cst_13 = arith.constant 0.000000e+00 : f32
      %20 = vector.broadcast %cst_13 : f32 to vector<16x1xf32>
      %c0_14 = arith.constant 0 : index
      %c0_15 = arith.constant 0 : index
      %21 = vector.load %arg11[%c0_14, %c0_15] : memref<16x1xf32, #tpu.memory_space<vmem>>, vector<16x1xf32>
      tpu.vector_store %arg11[%c0_14, %c0_15], %20 {strides = array<i32>} : memref<16x1xf32, #tpu.memory_space<vmem>>, vector<16x1xf32>,
      %cst_16 = arith.constant 0.000000e+00 : f32
      %22 = vector.broadcast %cst_16 : f32 to vector<16x8xf32>
      %c0_17 = arith.constant 0 : index
      %c0_18 = arith.constant 0 : index
      %23 = vector.load %arg12[%c0_17, %c0_18] : memref<16x8xf32, #tpu.memory_space<vmem>>, vector<16x8xf32>
      tpu.vector_store %arg12[%c0_17, %c0_18], %22 {strides = array<i32>} : memref<16x8xf32, #tpu.memory_space<vmem>>, vector<16x8xf32>,
    } else {
    }
    %5 = arith.cmpi slt, %1, %0 : i32
    %6 = arith.extui %5 : i1 to i32
    %c0_i32_1 = arith.constant 0 : i32
    %7 = arith.cmpi ne, %6, %c0_i32_1 : i32
    scf.if %7 {
      %c0_4 = arith.constant 0 : index
      %c0_5 = arith.constant 0 : index
      %11 = vector.load %arg9[%c0_4, %c0_5] : memref<16x8xbf16, #tpu.memory_space<vmem>>, vector<16x8xbf16>
      %c0_6 = arith.constant 0 : index
      %c0_7 = arith.constant 0 : index
      %c0_8 = arith.constant 0 : index
      %c0_9 = arith.constant 0 : index
      %12 = vector.load %arg6[%c0_6, %c0_7, %c0_8, %c0_9] : memref<1x1x16x8xbf16, #tpu.memory_space<vmem>>, vector<1x1x16x8xbf16>
      %13 = vector.shape_cast %12 : vector<1x1x16x8xbf16> to vector<16x8xbf16>
      %c0_10 = arith.constant 0 : index
      %c0_11 = arith.constant 0 : index
      %c0_12 = arith.constant 0 : index
      %c0_13 = arith.constant 0 : index
      %14 = vector.load %arg7[%c0_10, %c0_11, %c0_12, %c0_13] : memref<1x1x16x8xbf16, #tpu.memory_space<vmem>>, vector<1x1x16x8xbf16>
      %15 = vector.shape_cast %14 : vector<1x1x16x8xbf16> to vector<16x8xbf16>
      %cst = arith.constant dense<0.000000e+00> : vector<16x16xf32>
      %16 = tpu.matmul %11, %13, %cst {dimension_numbers = #tpu.dot_dimension_numbers<[1], [1], [0], [0], [0, 0, 1, 0], [], []>} : vector<16x8xbf16>, vector<16x8xbf16>, vector<16x16xf32> -> vector<16x16xf32>
      %17 = tpu.iota {dimensions = array<i32: 1>} : vector<16x16xi32>
      %18 = vector.broadcast %1 : i32 to vector<16x16xi32>
      %19 = arith.addi %18, %17 : vector<16x16xi32>
      %20 = vector.broadcast %0 : i32 to vector<16x16xi32>
      %21 = arith.cmpi slt, %19, %20 : vector<16x16xi32>
      %cst_14 = arith.constant 0xFF800000 : f32
      %22 = vector.broadcast %cst_14 : f32 to vector<16x16xf32>
      %23 = arith.select %21, %16, %22 : vector<16x16xi1>, vector<16x16xf32>
      %c0_15 = arith.constant 0 : index
      %c0_16 = arith.constant 0 : index
      %24 = vector.load %arg10[%c0_15, %c0_16] : memref<16x1xf32, #tpu.memory_space<vmem>>, vector<16x1xf32>
      %cst_17 = arith.constant dense<0xFF800000> : vector<16xf32>
      %25 = vector.multi_reduction <maximumf>, %23, %cst_17 [1] : vector<16x16xf32> to vector<16xf32>
      %26 = vector.shape_cast %25 : vector<16xf32> to vector<16x1xf32>
      %27 = arith.maximumf %24, %26 : vector<16x1xf32>
      %28 = arith.subf %24, %27 : vector<16x1xf32>
      %29 = math.exp %28 : vector<16x1xf32>
      %30 = vector.broadcast %27 : vector<16x1xf32> to vector<16x16xf32>
      %31 = arith.subf %23, %30 : vector<16x16xf32>
      %32 = math.exp %31 : vector<16x16xf32>
      %c0_18 = arith.constant 0 : index
      %c0_19 = arith.constant 0 : index
      %33 = vector.load %arg11[%c0_18, %c0_19] : memref<16x1xf32, #tpu.memory_space<vmem>>, vector<16x1xf32>
      %34 = arith.mulf %29, %33 : vector<16x1xf32>
      %cst_20 = arith.constant dense<0.000000e+00> : vector<16xf32>
      %35 = vector.multi_reduction <add>, %32, %cst_20 [1] : vector<16x16xf32> to vector<16xf32>
      %36 = vector.shape_cast %35 : vector<16xf32> to vector<16x1xf32>
      %37 = arith.addf %34, %36 : vector<16x1xf32>
      %c0_21 = arith.constant 0 : index
      %c0_22 = arith.constant 0 : index
      %38 = vector.load %arg11[%c0_21, %c0_22] : memref<16x1xf32, #tpu.memory_space<vmem>>, vector<16x1xf32>
      tpu.vector_store %arg11[%c0_21, %c0_22], %37 {strides = array<i32>} : memref<16x1xf32, #tpu.memory_space<vmem>>, vector<16x1xf32>,
      %c0_23 = arith.constant 0 : index
      %c0_24 = arith.constant 0 : index
      %39 = vector.load %arg12[%c0_23, %c0_24] : memref<16x8xf32, #tpu.memory_space<vmem>>, vector<16x8xf32>
      %40 = vector.broadcast %29 : vector<16x1xf32> to vector<16x8xf32>
      %41 = arith.mulf %40, %39 : vector<16x8xf32>
      %42 = arith.truncf %32 : vector<16x16xf32> to vector<16x16xbf16>
      %cst_25 = arith.constant dense<0.000000e+00> : vector<16x8xf32>
      %43 = tpu.matmul %42, %15, %cst_25 {dimension_numbers = #tpu.dot_dimension_numbers<[1], [0], [0], [1], [0, 0, 1, 1], [], []>} : vector<16x16xbf16>, vector<16x8xbf16>, vector<16x8xf32> -> vector<16x8xf32>
      %44 = arith.addf %41, %43 : vector<16x8xf32>
      %c0_26 = arith.constant 0 : index
      %c0_27 = arith.constant 0 : index
      %45 = vector.load %arg12[%c0_26, %c0_27] : memref<16x8xf32, #tpu.memory_space<vmem>>, vector<16x8xf32>
      tpu.vector_store %arg12[%c0_26, %c0_27], %44 {strides = array<i32>} : memref<16x8xf32, #tpu.memory_space<vmem>>, vector<16x8xf32>,
      %c0_28 = arith.constant 0 : index
      %c0_29 = arith.constant 0 : index
      %46 = vector.load %arg10[%c0_28, %c0_29] : memref<16x1xf32, #tpu.memory_space<vmem>>, vector<16x1xf32>
      tpu.vector_store %arg10[%c0_28, %c0_29], %27 {strides = array<i32>} : memref<16x1xf32, #tpu.memory_space<vmem>>, vector<16x1xf32>,
    } else {
    }
    %c0_i32_2 = arith.constant 0 : i32
    %8 = arith.cmpi eq, %arg3, %c0_i32_2 : i32
    %9 = arith.extui %8 : i1 to i32
    %c0_i32_3 = arith.constant 0 : i32
    %10 = arith.cmpi ne, %9, %c0_i32_3 : i32
    scf.if %10 {
      %c0_4 = arith.constant 0 : index
      %c0_5 = arith.constant 0 : index
      %11 = vector.load %arg11[%c0_4, %c0_5] : memref<16x1xf32, #tpu.memory_space<vmem>>, vector<16x1xf32>
      %12 = tpu.reciprocal %11 {approx = true} : vector<16x1xf32> -> vector<16x1xf32>
      %c0_6 = arith.constant 0 : index
      %c0_7 = arith.constant 0 : index
      %13 = vector.load %arg12[%c0_6, %c0_7] : memref<16x8xf32, #tpu.memory_space<vmem>>, vector<16x8xf32>
      %14 = vector.broadcast %12 : vector<16x1xf32> to vector<16x8xf32>
      %15 = arith.mulf %13, %14 : vector<16x8xf32>
      %16 = arith.truncf %15 : vector<16x8xf32> to vector<16x8xbf16>
      %c0_8 = arith.constant 0 : index
      %c0_9 = arith.constant 0 : index
      %c0_10 = arith.constant 0 : index
      %c0_11 = arith.constant 0 : index
      %17 = vector.load %arg8[%c0_8, %c0_9, %c0_10, %c0_11] : memref<1x1x16x8xbf16, #tpu.memory_space<vmem>>, vector<1x1x16x8xbf16>
      %18 = vector.shape_cast %17 : vector<1x1x16x8xbf16> to vector<16x8xbf16>
      %19 = vector.shape_cast %16 : vector<16x8xbf16> to vector<1x1x16x8xbf16>
      tpu.vector_store %arg8[%c0_8, %c0_9, %c0_10, %c0_11], %19 {strides = array<i32>} : memref<1x1x16x8xbf16, #tpu.memory_space<vmem>>, vector<1x1x16x8xbf16>,
    } else {
    }
    return
  }
  func.func @transform_0(%arg0: i32, %arg1: i32, %arg2: i32, %arg3: i32, %arg4: memref<2xi32, #tpu.memory_space<smem>>) -> (i32, i32, i32, i32) {
    %c0_i32 = arith.constant 0 : i32
    %c0_i32_0 = arith.constant 0 : i32
    return %arg0, %arg1, %arg2, %c0_i32 : i32, i32, i32, i32
  }
  func.func @transform_1(%arg0: i32, %arg1: i32, %arg2: i32, %arg3: i32, %arg4: memref<2xi32, #tpu.memory_space<smem>>) -> (i32, i32, i32, i32) {
    %c1 = arith.constant 1 : index
    %0 = memref.load %arg4[%c1] : memref<2xi32, #tpu.memory_space<smem>>
    %1 = arith.minsi %arg3, %0 : i32
    %c0_i32 = arith.constant 0 : i32
    %c0_i32_0 = arith.constant 0 : i32
    return %arg0, %arg1, %1, %c0_i32 : i32, i32, i32, i32
  }
  func.func @transform_2(%arg0: i32, %arg1: i32, %arg2: i32, %arg3: i32, %arg4: memref<2xi32, #tpu.memory_space<smem>>) -> (i32, i32, i32, i32) {
    %c1 = arith.constant 1 : index
    %0 = memref.load %arg4[%c1] : memref<2xi32, #tpu.memory_space<smem>>
    %1 = arith.minsi %arg3, %0 : i32
    %c0_i32 = arith.constant 0 : i32
    %c0_i32_0 = arith.constant 0 : i32
    return %arg0, %arg1, %1, %c0_i32 : i32, i32, i32, i32
  }
  func.func @transform_3(%arg0: i32, %arg1: i32, %arg2: i32, %arg3: i32, %arg4: memref<2xi32, #tpu.memory_space<smem>>) -> (i32, i32, i32, i32) {
    %c0_i32 = arith.constant 0 : i32
    %c0_i32_0 = arith.constant 0 : i32
    return %arg0, %arg1, %arg2, %c0_i32 : i32, i32, i32, i32
  }
}

module attributes {stable_mosaic.version = 11 : i64} {
  func.func @_matmul_kernel(%arg0: i32, %arg1: i32, %arg2: i32, %arg3: memref<16x32xbf16, #tpu.memory_space<vmem>>, %arg4: memref<32x32xbf16, #tpu.memory_space<vmem>>, %arg5: memref<16x32xf32, #tpu.memory_space<vmem>>, %arg6: memref<16x32xf32, #tpu.memory_space<vmem>>) attributes {dimension_semantics = [#tpu.dimension_semantics<parallel>, #tpu.dimension_semantics<parallel>, #tpu.dimension_semantics<arbitrary>], iteration_bounds = array<i64: 1, 1, 1>, scalar_prefetch = 0 : i64, scratch_operands = 1 : i64, tpu.core_type = #tpu.core_type<tc>, window_params = [{transform_indices = @transform_0, window_bounds = array<i64: 16, 32>}, {transform_indices = @transform_1, window_bounds = array<i64: 32, 32>}, {transform_indices = @transform_2, window_bounds = array<i64: 16, 32>}]} {
    %c0_i32 = arith.constant 0 : i32
    %0 = arith.cmpi eq, %arg2, %c0_i32 : i32
    %1 = arith.extui %0 : i1 to i32
    %c0_i32_0 = arith.constant 0 : i32
    %2 = arith.cmpi ne, %1, %c0_i32_0 : i32
    scf.if %2 {
      %cst_10 = arith.constant 0.000000e+00 : f32
      %12 = vector.broadcast %cst_10 : f32 to vector<16x32xf32>
      %c0_11 = arith.constant 0 : index
      %c0_12 = arith.constant 0 : index
      %13 = vector.load %arg6[%c0_11, %c0_12] : memref<16x32xf32, #tpu.memory_space<vmem>>, vector<16x32xf32>
      tpu.vector_store %arg6[%c0_11, %c0_12], %12 {strides = array<i32>} : memref<16x32xf32, #tpu.memory_space<vmem>>, vector<16x32xf32>,
    } else {
    }
    %c0 = arith.constant 0 : index
    %c0_1 = arith.constant 0 : index
    %3 = vector.load %arg6[%c0, %c0_1] : memref<16x32xf32, #tpu.memory_space<vmem>>, vector<16x32xf32>
    %c0_2 = arith.constant 0 : index
    %c0_3 = arith.constant 0 : index
    %4 = vector.load %arg3[%c0_2, %c0_3] : memref<16x32xbf16, #tpu.memory_space<vmem>>, vector<16x32xbf16>
    %c0_4 = arith.constant 0 : index
    %c0_5 = arith.constant 0 : index
    %5 = vector.load %arg4[%c0_4, %c0_5] : memref<32x32xbf16, #tpu.memory_space<vmem>>, vector<32x32xbf16>
    %cst = arith.constant dense<0.000000e+00> : vector<16x32xf32>
    %6 = tpu.matmul %4, %5, %cst {dimension_numbers = #tpu.dot_dimension_numbers<[1], [0], [0], [1], [0, 0, 1, 1], [], []>} : vector<16x32xbf16>, vector<32x32xbf16>, vector<16x32xf32> -> vector<16x32xf32>
    %7 = arith.addf %3, %6 : vector<16x32xf32>
    %c0_6 = arith.constant 0 : index
    %c0_7 = arith.constant 0 : index
    %8 = vector.load %arg6[%c0_6, %c0_7] : memref<16x32xf32, #tpu.memory_space<vmem>>, vector<16x32xf32>
    tpu.vector_store %arg6[%c0_6, %c0_7], %7 {strides = array<i32>} : memref<16x32xf32, #tpu.memory_space<vmem>>, vector<16x32xf32>,
    %c0_i32_8 = arith.constant 0 : i32
    %9 = arith.cmpi eq, %arg2, %c0_i32_8 : i32
    %10 = arith.extui %9 : i1 to i32
    %c0_i32_9 = arith.constant 0 : i32
    %11 = arith.cmpi ne, %10, %c0_i32_9 : i32
    scf.if %11 {
      %c0_10 = arith.constant 0 : index
      %c0_11 = arith.constant 0 : index
      %12 = vector.load %arg6[%c0_10, %c0_11] : memref<16x32xf32, #tpu.memory_space<vmem>>, vector<16x32xf32>
      %c0_12 = arith.constant 0 : index
      %c0_13 = arith.constant 0 : index
      %13 = vector.load %arg5[%c0_12, %c0_13] : memref<16x32xf32, #tpu.memory_space<vmem>>, vector<16x32xf32>
      tpu.vector_store %arg5[%c0_12, %c0_13], %12 {strides = array<i32>} : memref<16x32xf32, #tpu.memory_space<vmem>>, vector<16x32xf32>,
    } else {
    }
    return
  }
  func.func @transform_0(%arg0: i32, %arg1: i32, %arg2: i32) -> (i32, i32) {
    %c0_i32 = arith.constant 0 : i32
    return %arg0, %arg2 : i32, i32
  }
  func.func @transform_1(%arg0: i32, %arg1: i32, %arg2: i32) -> (i32, i32) {
    %c0_i32 = arith.constant 0 : i32
    return %arg2, %arg1 : i32, i32
  }
  func.func @transform_2(%arg0: i32, %arg1: i32, %arg2: i32) -> (i32, i32) {
    %c0_i32 = arith.constant 0 : i32
    return %arg0, %arg1 : i32, i32
  }
}

</mosaic_0001>

<llo_original>
// kernel: _attention_forward.3
$region0: #{_attention_forward.3}
  #allocation0 [shape = 'u32[]', space=smem, size = 0x4, offset = 0x4, fixed_abs, tag = 'smem constant byte address 0x4 - core index']
  #allocation1 [shape = 'u32[72,128]{1,0:T(1,128)}', space=vmem, size = 0x9000, scoped, tag = 'internal scratch']
  #allocation2 [shape = 'f32[16,64]{1,0:T(8,128)}', space=vmem, size = 0x2000, scoped, tag = 'scratch operand']
  %s0 = inlined_call_operand.vmem [shape: bf16[16,32], index: 0, kind: input, shape index: {}]
  %s1 = inlined_call_operand.vmem [shape: bf16[32,64], index: 1, kind: input, shape index: {}]
  %s2 = inlined_call_operand.vmem [shape: bf16[16,64], index: 2, kind: output, shape index: {}]
  %s3 = sld [smem:[#allocation0]]
  $region26: #{_attention_forward.3} parent=0
    _
  %s5 = ssub.s32 1, %s3
  %s6 = scalar_select 0, %s5, %s3
  // Predicated region
  $region2: #{_attention_forward.3} parent=0 // pred_check
    _
  $region3: #{_attention_forward.3} parent=0 // pred_check_branch
    %8 = sbr.rel (0) target = $region5
  $region4: #{_attention_forward.3} parent=0 // pred_region
    _
  $region5: #{_attention_forward.3} parent=0 // pred_fallthru
    _
  // Predicated region
  $region6: #{_attention_forward.3} parent=0 // pred_check
    _
  $region7: #{_attention_forward.3} parent=0 // pred_check_branch
    %10 = sbr.rel (0) target = $region9
  $region8: #{_attention_forward.3} parent=0 // pred_region
    _
  $region9: #{_attention_forward.3} parent=0 // pred_fallthru
    _
  %p12 = scmp.eq.s32.totalorder 0, 0
  // Predicated region
  $region10: #{_attention_forward.3} parent=0 // pred_check
    %p13 = pneg %p12
  $region11: #{_attention_forward.3} parent=0 // pred_check_branch
    %15 = sbr.rel (%p13) target = $region13
  $region12: #{_attention_forward.3} parent=0 // pred_region
    %vm16 = vcmask 523264
    %17 = vst.msk [vmem:[#allocation2] sm:$0xff] %vm16, 0.0
    %18 = vst.msk [vmem:[#allocation2 + $0x8] sm:$0xff] %vm16, 0.0
  $region13: #{_attention_forward.3} parent=0 // pred_fallthru
    _
  %v19 = vld [vmem:[#allocation2] sm:$0xff]
  %v20 = vld [vmem:[#allocation2 + $0x8] sm:$0xff]
  %v21 = vld [vmem:[%s0] sm:$0xf]
  %v22 = vld [vmem:[%s0 + $0x4] sm:$0xf]
  %v23 = vld [vmem:[%s1] sm:$0xf]
  %v24 = vld [vmem:[%s1 + $0x4] sm:$0xf]
  %v25 = vld [vmem:[%s1 + $0x8] sm:$0xf]
  %v26 = vld [vmem:[%s1 + $0xc] sm:$0xf]
  %v29 = vunpack.c.l.b16 %v21
  %v30 = vunpack.c.l.b16 %v22
  %v31 = vpack.c.b16 %v30, %v29
  %v36 = vunpack.c.l.b16 %v23
  %v37 = vunpack.c.l.b16 %v24
  %v38 = vunpack.c.l.b16 %v25
  %v39 = vunpack.c.l.b16 %v26
  %v40 = vpack.c.b16 %v37, %v36
  %v41 = vpack.c.b16 %v39, %v38
  %vm44 = vcmask 261120
  %v46 = vsel %vm44, %v31, 0
  %48 = vmatpush.bf16.msra.mxu0 0
  %49 = vmatpush.bf16.msra.mxu0 0
  %50 = vmatpush.bf16.msra.mxu0 0
  %51 = vmatpush.bf16.msra.mxu0 0
  %52 = vmatpush.bf16.msra.mxu0 0
  %53 = vmatpush.bf16.msra.mxu0 0
  %54 = vmatpush.bf16.msra.mxu0 %v41
  %55 = vmatpush.bf16.msra.mxu0 %v40
  %56 = vmatmul.bf16.gmra.mxu0 %v46
  %v57 = vpop.f32.mrf.mxu0
  %v58 = vadd.f32 0.0, %v57
  %v59 = vpop.f32.mrf.mxu0
  %v60 = vadd.f32 0.0, %v59
  %61 = vdwg.mxu0
  %v62 = vadd.f32 %v19, %v58
  %v63 = vadd.f32 %v20, %v60
  %vm64 = vcmask 523264
  %65 = vst.msk [vmem:[#allocation2] sm:$0xff] %vm64, %v62
  %66 = vst.msk [vmem:[#allocation2 + $0x8] sm:$0xff] %vm64, %v63
  // Predicated region
  $region14: #{_attention_forward.3} parent=0 // pred_check
    %p67 = pneg %p12
  $region15: #{_attention_forward.3} parent=0 // pred_check_branch
    %69 = sbr.rel (%p67) target = $region17
  $region16: #{_attention_forward.3} parent=0 // pred_region
    %v70 = vld [vmem:[#allocation2] sm:$0xff]
    %v71 = vld [vmem:[#allocation2 + $0x8] sm:$0xff]
    %v72 = vpack.c.bf16 %v70, %v70
    %v73 = vpack.c.bf16 %v71, %v71
    %vm74 = vcmask 519168
    %75 = vst.msk [vmem:[%s2] sm:$0xf] %vm74, %v72
    %76 = vst.msk [vmem:[%s2 + $0x4] sm:$0xf] %vm74, %v73
  $region17: #{_attention_forward.3} parent=0 // pred_fallthru
    _
  // Predicated region
  $region18: #{_attention_forward.3} parent=0 // pred_check
    _
  $region19: #{_attention_forward.3} parent=0 // pred_check_branch
    %78 = sbr.rel (0) target = $region21
  $region20: #{_attention_forward.3} parent=0 // pred_region
    _
  $region21: #{_attention_forward.3} parent=0 // pred_fallthru
    _
  // Predicated region
  $region22: #{_attention_forward.3} parent=0 // pred_check
    _
  $region23: #{_attention_forward.3} parent=0 // pred_check_branch
    %80 = sbr.rel (0) target = $region25
  $region24: #{_attention_forward.3} parent=0 // pred_region
    _
  $region25: #{_attention_forward.3} parent=0 // pred_fallthru
    _

// kernel: _attention_forward.5
$region0: #{_attention_forward.5}
  #allocation0 [shape = 'u32[]', space=smem, size = 0x4, offset = 0x4, fixed_abs, tag = 'smem constant byte address 0x4 - core index']
  #allocation1 [shape = 'u32[72,128]{1,0:T(1,128)}', space=vmem, size = 0x9000, scoped, tag = 'internal scratch']
  #allocation2 [shape = 'f32[16,32]{1,0:T(8,128)}', space=vmem, size = 0x2000, scoped, tag = 'scratch operand']
  %s0 = inlined_call_operand.vmem [shape: bf16[16,32], index: 0, kind: input, shape index: {}]
  %s1 = inlined_call_operand.vmem [shape: bf16[32,32], index: 1, kind: input, shape index: {}]
  %s2 = inlined_call_operand.hbm [shape: f32[16,32], index: 2, kind: output, shape index: {}]
  %s3 = sld [smem:[#allocation0]]
  $region26: #{_attention_forward.5} parent=0
    _
  %s5 = ssub.s32 1, %s3
  %s6 = scalar_select 0, %s5, %s3
  $region1: #{_attention_forward.5} parent=0
    #allocation3 [shape = 'u8[8192]{0}', space=vmem, size = 0x2000, scoped, tag = 'output window, operand 0, single buffered']
    #allocation4 [shape = 's32[1]{0}', space=sflag, size = 0x4, scoped, tag = 'scoped memory for _attention_forward.5']
    %7 = vsyncpa [#allocation4], 0
    // Predicated region
    $region2: #{_attention_forward.5} parent=1 // pred_check
      _
    $region3: #{_attention_forward.5} parent=1 // pred_check_branch
      %9 = sbr.rel (0) target = $region5
    $region4: #{_attention_forward.5} parent=1 // pred_region
      _
    $region5: #{_attention_forward.5} parent=1 // pred_fallthru
      _
    // Predicated region
    $region6: #{_attention_forward.5} parent=1 // pred_check
      _
    $region7: #{_attention_forward.5} parent=1 // pred_check_branch
      %11 = sbr.rel (0) target = $region9
    $region8: #{_attention_forward.5} parent=1 // pred_region
      _
    $region9: #{_attention_forward.5} parent=1 // pred_fallthru
      _
    %p13 = scmp.eq.s32.totalorder 0, 0
    // Predicated region
    $region10: #{_attention_forward.5} parent=1 // pred_check
      %p14 = pneg %p13
    $region11: #{_attention_forward.5} parent=1 // pred_check_branch
      %16 = sbr.rel (%p14) target = $region13
    $region12: #{_attention_forward.5} parent=1 // pred_region
      %vm17 = vcmask 261120
      %18 = vst.msk [vmem:[#allocation2] sm:$0xff] %vm17, 0.0
      %19 = vst.msk [vmem:[#allocation2 + $0x8] sm:$0xff] %vm17, 0.0
    $region13: #{_attention_forward.5} parent=1 // pred_fallthru
      _
    %v20 = vld [vmem:[#allocation2] sm:$0xff]
    %v21 = vld [vmem:[#allocation2 + $0x8] sm:$0xff]
    %v22 = vld [vmem:[%s0] sm:$0xf]
    %v23 = vld [vmem:[%s0 + $0x4] sm:$0xf]
    %v24 = vld [vmem:[%s1] sm:$0xf]
    %v25 = vld [vmem:[%s1 + $0x4] sm:$0xf]
    %v26 = vld [vmem:[%s1 + $0x8] sm:$0xf]
    %v27 = vld [vmem:[%s1 + $0xc] sm:$0xf]
    %v30 = vunpack.c.l.b16 %v22
    %v31 = vunpack.c.l.b16 %v23
    %v32 = vpack.c.b16 %v31, %v30
    %v37 = vunpack.c.l.b16 %v24
    %v38 = vunpack.c.l.b16 %v25
    %v39 = vunpack.c.l.b16 %v26
    %v40 = vunpack.c.l.b16 %v27
    %v41 = vpack.c.b16 %v38, %v37
    %v42 = vpack.c.b16 %v40, %v39
    %vm45 = vcmask 261120
    %v47 = vsel %vm45, %v32, 0
    %49 = vmatpush.bf16.msra.mxu0 0
    %50 = vmatpush.bf16.msra.mxu0 0
    %51 = vmatpush.bf16.msra.mxu0 0
    %52 = vmatpush.bf16.msra.mxu0 0
    %53 = vmatpush.bf16.msra.mxu0 0
    %54 = vmatpush.bf16.msra.mxu0 0
    %55 = vmatpush.bf16.msra.mxu0 %v42
    %56 = vmatpush.bf16.msra.mxu0 %v41
    %57 = vmatmul.bf16.gmra.mxu0 %v47
    %v58 = vpop.f32.mrf.mxu0
    %v59 = vadd.f32 0.0, %v58
    %v60 = vpop.f32.mrf.mxu0
    %v61 = vadd.f32 0.0, %v60
    %62 = vdwg.mxu0
    %v63 = vadd.f32 %v20, %v59
    %v64 = vadd.f32 %v21, %v61
    %65 = vst.msk [vmem:[#allocation2] sm:$0xff] %vm45, %v63
    %66 = vst.msk [vmem:[#allocation2 + $0x8] sm:$0xff] %vm45, %v64
    // Predicated region
    $region14: #{_attention_forward.5} parent=1 // pred_check
      %p67 = pneg %p13
    $region15: #{_attention_forward.5} parent=1 // pred_check_branch
      %69 = sbr.rel (%p67) target = $region17
    $region16: #{_attention_forward.5} parent=1 // pred_region
      %v70 = vld [vmem:[#allocation2] sm:$0xff]
      %v71 = vld [vmem:[#allocation2 + $0x8] sm:$0xff]
      %72 = vst.msk [vmem:[#allocation3] sm:$0xff] %vm45, %v70
      %73 = vst.msk [vmem:[#allocation3 + $0x8] sm:$0xff] %vm45, %v71
    $region17: #{_attention_forward.5} parent=1 // pred_fallthru
      _
    // Predicated region
    $region18: #{_attention_forward.5} parent=1 // pred_check
      _
    $region19: #{_attention_forward.5} parent=1 // pred_check_branch
      %75 = sbr.rel (0) target = $region21
    $region20: #{_attention_forward.5} parent=1 // pred_region
      %77 = vsyncadd [#allocation4], 0
      %s78 = sshll.u32 [#allocation3], 4
      %s79 = int_to_ptr.vmem [resolvable:$true] %s78
      %s80 = sshll.u32 %s2, 4
      %s81 = int_to_ptr.hbm [resolvable:$true] %s80
      %86 = dma.vmem_to_hbm [thread:$0]  %s79, 256, %s81, [#allocation4], 128, 128, 8
    $region21: #{_attention_forward.5} parent=1 // pred_fallthru
      _
    // Predicated region
    $region22: #{_attention_forward.5} parent=1 // pred_check
      _
    $region23: #{_attention_forward.5} parent=1 // pred_check_branch
      %88 = sbr.rel (0) target = $region25
    $region24: #{_attention_forward.5} parent=1 // pred_region
      %90 = dma.done [#allocation4], 256
    $region25: #{_attention_forward.5} parent=1 // pred_fallthru
      _
    %91 = vsyncpa [#allocation4], 1

// kernel: _attention_forward.4
$region0: #{_attention_forward.4}
  #allocation0 [shape = 'u32[]', space=smem, size = 0x4, offset = 0x4, fixed_abs, tag = 'smem constant byte address 0x4 - core index']
  #allocation1 [shape = 'u32[72,128]{1,0:T(1,128)}', space=vmem, size = 0x9000, scoped, tag = 'internal scratch']
  #allocation2 [shape = 'bf16[16,8]{1,0:T(8,128)(2,1)}', space=vmem, size = 0x1000, scoped, tag = 'scratch operand']
  #allocation3 [shape = 'f32[16,1]{1,0:T(8,128)}', space=vmem, size = 0x2000, scoped, tag = 'scratch operand']
  #allocation4 [shape = 'f32[16,1]{1,0:T(8,128)}', space=vmem, size = 0x2000, scoped, tag = 'scratch operand']
  #allocation5 [shape = 'f32[16,8]{1,0:T(8,128)}', space=vmem, size = 0x2000, scoped, tag = 'scratch operand']
  #allocation6 [shape = 's32[1]{0}', space=sflag, size = 0x4, scoped, tag = 'scoped memory for _attention_forward.4']
  #allocation7 [shape = 'u8[512]{0}', space=smem, size = 0x200, scoped, tag = 'prefetched SMEM operand 0']
  %s0 = inlined_call_operand.vmem [shape: s32[2], index: 0, kind: input, shape index: {}]
  %s1 = inlined_call_operand.vmem [shape: bf16[2,2,16,8], index: 1, kind: input, shape index: {}]
  %s2 = inlined_call_operand.vmem [shape: bf16[2,2,16,8], index: 2, kind: input, shape index: {}]
  %s3 = inlined_call_operand.vmem [shape: bf16[2,2,16,8], index: 3, kind: input, shape index: {}]
  %s4 = inlined_call_operand.vmem [shape: bf16[2,2,16,8], index: 4, kind: output, shape index: {}]
  %s5 = sld [smem:[#allocation0]]
  $region57: #{_attention_forward.4} parent=0
    _
  %s7 = ssub.s32 1, %s5
  %s8 = scalar_select 0, %s7, %s5
  %s10 = sshll.u32 %s0, 4
  %s11 = int_to_ptr.vmem [resolvable:$true] %s10
  %13 = dma.vmem_to_smem %s11, 16, [#allocation7], [#allocation6]
  %15 = dma.done [#allocation6], 16
  %16 = sfence
  loop: start=0, step=1, limit=6
  $region2: #{_attention_forward.4} parent=0 // loop_pre_header
    _
  $region3: #{_attention_forward.4} parent=0 // loop_header
    %s18 = sphi 0, %s22
    %p19 = scmp.ge.s32.totalorder %s18, 6
    %s25 = sphi 0, %s51
    %s26 = sphi 0, %s47
    %s27 = sphi 0, %s43
    %s28 = sphi 0, %s39
    %s29 = sphi 0, %s25
    %s30 = sphi 0, %s26
    %s31 = sphi 0, %s27
    %s32 = sphi 0, %s28
    %s33 = sphi 0, %s29
    %s34 = sphi 0, %s30
    %s35 = sphi 0, %s31
    %s36 = sphi 0, %s32
    %s58 = sphi 0, %s60
    %s61 = sphi 0, %s58
    %s62 = sphi 0, %s61
    %s78 = sphi 0, %s62
    %s94 = sphi 0, %s96
    %s97 = sphi 0, %s94
    %s98 = sphi 0, %s97
    %s114 = sphi 0, %s98
    %s130 = sphi 0, %s132
    %s133 = sphi 0, %s130
    %s134 = sphi 0, %s133
    %s150 = sphi 0, %s134
    %s160 = sphi 0, %s162
    %s163 = sphi 0, %s160
    %s164 = sphi 0, %s163
    %s180 = sphi 0, %s164
  $region4: #{_attention_forward.4} parent=0 // loop_header_branch
    %21 = sbr.rel (%p19) target = $region8
  $region5: #{_attention_forward.4} parent=0 // loop_body
    %s23 = ssub.s32 %s18, 1
    %s24 = ssub.s32 %s18, 2
    %s37 = sadd.s32 1, %s28
    %p38 = scmp.ge.s32.totalorder %s37, 1
    %s39 = scalar_select %p38, 0, %s37
    %s40 = sadd.s32 1, %s27
    %s41 = scalar_select %p38, %s40, %s27
    %p42 = scmp.ge.s32.totalorder %s41, 1
    %s43 = scalar_select %p42, 0, %s41
    %s44 = sadd.s32 1, %s26
    %s45 = scalar_select %p42, %s44, %s26
    %p46 = scmp.ge.s32.totalorder %s45, 2
    %s47 = scalar_select %p46, 0, %s45
    %s48 = sadd.s32 1, %s25
    %s49 = scalar_select %p46, %s48, %s25
    %p50 = scmp.ge.s32.totalorder %s49, 2
    %s51 = scalar_select %p50, 0, %s49
    %s52 = ssub.s32 %s25, %s51
    %s53 = ssub.s32 %s26, %s47
    %s54 = sor.u32 %s52, %s53
    %s55 = ssub.s32 %s27, %s43
    %s56 = sor.u32 %s54, %s55
    %p57 = scmp.eq.s32.totalorder %s56, 0
    %s59 = sadd.s32 %s58, 1
    %s60 = scalar_select %p57, %s58, %s59
    %p63 = pneg %p57
    %p64 = scmp.eq.s32.totalorder %s18, 3
    %p65 = por %p63, %p64
    %p66 = scmp.ne.s32.totalorder %s58, %s61
    %p67 = scmp.eq.s32.totalorder %s18, 0
    %p68 = por %p66, %p67
    %p69 = scmp.ne.s32.totalorder %s58, %s61
    %p70 = scmp.eq.s32.totalorder %s23, 3
    %p71 = por %p69, %p70
    %p72 = scmp.ne.s32.totalorder %s61, %s62
    %p73 = scmp.eq.s32.totalorder %s23, 0
    %p74 = por %p72, %p73
    %p75 = scmp.ne.s32.totalorder %s61, %s62
    %p76 = scmp.eq.s32.totalorder %s24, 3
    %p77 = por %p75, %p76
    %p79 = scmp.ne.s32.totalorder %s62, %s78
    %p80 = scmp.eq.s32.totalorder %s24, 0
    %p81 = por %p79, %p80
    %s82 = sld [smem:[#allocation7 + $0x1]]
    %p83 = scmp.lt.s32.totalorder %s28, %s82
    %s84 = scalar_select %p83, %s28, %s82
    %s85 = sld [smem:[#allocation7 + $0x1]]
    %p86 = scmp.lt.s32.totalorder %s39, %s85
    %s87 = scalar_select %p86, %s39, %s85
    %s88 = ssub.s32 %s25, %s51
    %s89 = ssub.s32 %s26, %s47
    %s90 = sor.u32 %s88, %s89
    %s91 = ssub.s32 %s84, %s87
    %s92 = sor.u32 %s90, %s91
    %p93 = scmp.eq.s32.totalorder %s92, 0
    %s95 = sadd.s32 %s94, 1
    %s96 = scalar_select %p93, %s94, %s95
    %p99 = pneg %p93
    %p100 = scmp.eq.s32.totalorder %s18, 3
    %p101 = por %p99, %p100
    %p102 = scmp.ne.s32.totalorder %s94, %s97
    %p103 = scmp.eq.s32.totalorder %s18, 0
    %p104 = por %p102, %p103
    %p105 = scmp.ne.s32.totalorder %s94, %s97
    %p106 = scmp.eq.s32.totalorder %s23, 3
    %p107 = por %p105, %p106
    %p108 = scmp.ne.s32.totalorder %s97, %s98
    %p109 = scmp.eq.s32.totalorder %s23, 0
    %p110 = por %p108, %p109
    %p111 = scmp.ne.s32.totalorder %s97, %s98
    %p112 = scmp.eq.s32.totalorder %s24, 3
    %p113 = por %p111, %p112
    %p115 = scmp.ne.s32.totalorder %s98, %s114
    %p116 = scmp.eq.s32.totalorder %s24, 0
    %p117 = por %p115, %p116
    %s118 = sld [smem:[#allocation7 + $0x1]]
    %p119 = scmp.lt.s32.totalorder %s28, %s118
    %s120 = scalar_select %p119, %s28, %s118
    %s121 = sld [smem:[#allocation7 + $0x1]]
    %p122 = scmp.lt.s32.totalorder %s39, %s121
    %s123 = scalar_select %p122, %s39, %s121
    %s124 = ssub.s32 %s25, %s51
    %s125 = ssub.s32 %s26, %s47
    %s126 = sor.u32 %s124, %s125
    %s127 = ssub.s32 %s120, %s123
    %s128 = sor.u32 %s126, %s127
    %p129 = scmp.eq.s32.totalorder %s128, 0
    %s131 = sadd.s32 %s130, 1
    %s132 = scalar_select %p129, %s130, %s131
    %p135 = pneg %p129
    %p136 = scmp.eq.s32.totalorder %s18, 3
    %p137 = por %p135, %p136
    %p138 = scmp.ne.s32.totalorder %s130, %s133
    %p139 = scmp.eq.s32.totalorder %s18, 0
    %p140 = por %p138, %p139
    %p141 = scmp.ne.s32.totalorder %s130, %s133
    %p142 = scmp.eq.s32.totalorder %s23, 3
    %p143 = por %p141, %p142
    %p144 = scmp.ne.s32.totalorder %s133, %s134
    %p145 = scmp.eq.s32.totalorder %s23, 0
    %p146 = por %p144, %p145
    %p147 = scmp.ne.s32.totalorder %s133, %s134
    %p148 = scmp.eq.s32.totalorder %s24, 3
    %p149 = por %p147, %p148
    %p151 = scmp.ne.s32.totalorder %s134, %s150
    %p152 = scmp.eq.s32.totalorder %s24, 0
    %p153 = por %p151, %p152
    %s154 = ssub.s32 %s25, %s51
    %s155 = ssub.s32 %s26, %s47
    %s156 = sor.u32 %s154, %s155
    %s157 = ssub.s32 %s27, %s43
    %s158 = sor.u32 %s156, %s157
    %p159 = scmp.eq.s32.totalorder %s158, 0
    %s161 = sadd.s32 %s160, 1
    %s162 = scalar_select %p159, %s160, %s161
    %p165 = pneg %p159
    %p166 = scmp.eq.s32.totalorder %s18, 3
    %p167 = por %p165, %p166
    %p168 = scmp.ne.s32.totalorder %s160, %s163
    %p169 = scmp.eq.s32.totalorder %s18, 0
    %p170 = por %p168, %p169
    %p171 = scmp.ne.s32.totalorder %s160, %s163
    %p172 = scmp.eq.s32.totalorder %s23, 3
    %p173 = por %p171, %p172
    %p174 = scmp.ne.s32.totalorder %s163, %s164
    %p175 = scmp.eq.s32.totalorder %s23, 0
    %p176 = por %p174, %p175
    %p177 = scmp.ne.s32.totalorder %s163, %s164
    %p178 = scmp.eq.s32.totalorder %s24, 3
    %p179 = por %p177, %p178
    %p181 = scmp.ne.s32.totalorder %s164, %s180
    %p182 = scmp.eq.s32.totalorder %s24, 0
    %p183 = por %p181, %p182
    %p184 = scmp.le.s32.totalorder 1, %s18
    %p185 = scmp.lt.s32.totalorder %s18, 5
    %p186 = pnand %p184, %p185
    %p187 = pneg %p186
    // Predicated region
    $region9: #{_attention_forward.4} parent=5 // pred_check
      _
    $region10: #{_attention_forward.4} parent=5 // pred_check_branch
      %189 = sbr.rel (%p186) target = $region12
    $region11: #{_attention_forward.4} parent=5 // pred_region
      %s190 = ssub.s32 %s18, 1
    $region12: #{_attention_forward.4} parent=5 // pred_fallthru
      _
    %p191 = scmp.lt.s32.totalorder %s18, 4
    // Predicated region
    $region13: #{_attention_forward.4} parent=5 // pred_check
      %p192 = pneg %p191
    $region14: #{_attention_forward.4} parent=5 // pred_check_branch
      %194 = sbr.rel (%p192) target = $region16
    $region15: #{_attention_forward.4} parent=5 // pred_region
      // Predicated region
      $region17: #{_attention_forward.4} parent=15 // pred_check
        %p195 = pneg %p68
      $region18: #{_attention_forward.4} parent=15 // pred_check_branch
        %197 = sbr.rel (%p195) target = $region20
      $region19: #{_attention_forward.4} parent=15 // pred_region
        %s198 = smul.u32 2, %s27
        %p199 = scmp.lt.s32.totalorder %s25, 1
        %s200 = scalar_select %p199, %s25, 1
        %p201 = scmp.lt.s32.totalorder %s26, 1
        %s202 = scalar_select %p201, %s26, 1
        %p203 = scmp.lt.s32.totalorder %s198, 1
        %s204 = scalar_select %p203, %s198, 1
        %s205 = smul.addr %s202, 2
        %s206 = sadd.s32 %s204, %s205
        %s207 = smul.addr %s200, 4
        %s208 = sadd.s32 %s206, %s207
        %s209 = smul.addr %s208, 4
        %s210 = scalar_lea.vmem %s1, %s209
        %s211 = smul.u32 2, %s27
      $region20: #{_attention_forward.4} parent=15 // pred_fallthru
        _
      // Predicated region
      $region21: #{_attention_forward.4} parent=15 // pred_check
        %p212 = pneg %p104
      $region22: #{_attention_forward.4} parent=15 // pred_check_branch
        %214 = sbr.rel (%p212) target = $region24
      $region23: #{_attention_forward.4} parent=15 // pred_region
        %s215 = sld [smem:[#allocation7 + $0x1]]
        %p216 = scmp.lt.s32.totalorder %s28, %s215
        %s217 = scalar_select %p216, %s28, %s215
        %s218 = smul.u32 2, %s217
        %p219 = scmp.lt.s32.totalorder %s25, 1
        %s220 = scalar_select %p219, %s25, 1
        %p221 = scmp.lt.s32.totalorder %s26, 1
        %s222 = scalar_select %p221, %s26, 1
        %p223 = scmp.lt.s32.totalorder %s218, 1
        %s224 = scalar_select %p223, %s218, 1
        %s225 = smul.addr %s222, 2
        %s226 = sadd.s32 %s224, %s225
        %s227 = smul.addr %s220, 4
        %s228 = sadd.s32 %s226, %s227
        %s229 = smul.addr %s228, 4
        %s230 = scalar_lea.vmem %s2, %s229
        %s231 = sld [smem:[#allocation7 + $0x1]]
        %p232 = scmp.lt.s32.totalorder %s28, %s231
        %s233 = scalar_select %p232, %s28, %s231
        %s234 = smul.u32 2, %s233
      $region24: #{_attention_forward.4} parent=15 // pred_fallthru
        _
      // Predicated region
      $region25: #{_attention_forward.4} parent=15 // pred_check
        %p235 = pneg %p140
      $region26: #{_attention_forward.4} parent=15 // pred_check_branch
        %237 = sbr.rel (%p235) target = $region28
      $region27: #{_attention_forward.4} parent=15 // pred_region
        %s238 = sld [smem:[#allocation7 + $0x1]]
        %p239 = scmp.lt.s32.totalorder %s28, %s238
        %s240 = scalar_select %p239, %s28, %s238
        %s241 = smul.u32 2, %s240
        %p242 = scmp.lt.s32.totalorder %s25, 1
        %s243 = scalar_select %p242, %s25, 1
        %p244 = scmp.lt.s32.totalorder %s26, 1
        %s245 = scalar_select %p244, %s26, 1
        %p246 = scmp.lt.s32.totalorder %s241, 1
        %s247 = scalar_select %p246, %s241, 1
        %s248 = smul.addr %s245, 2
        %s249 = sadd.s32 %s247, %s248
        %s250 = smul.addr %s243, 4
        %s251 = sadd.s32 %s249, %s250
        %s252 = smul.addr %s251, 4
        %s253 = scalar_lea.vmem %s3, %s252
        %s254 = sld [smem:[#allocation7 + $0x1]]
        %p255 = scmp.lt.s32.totalorder %s28, %s254
        %s256 = scalar_select %p255, %s28, %s254
        %s257 = smul.u32 2, %s256
      $region28: #{_attention_forward.4} parent=15 // pred_fallthru
        _
    $region16: #{_attention_forward.4} parent=5 // pred_fallthru
      _
    %p258 = scmp.le.s32.totalorder 1, %s18
    %p259 = scmp.lt.s32.totalorder %s18, 5
    %p260 = pnand %p258, %p259
    %p261 = pneg %p260
    // Predicated region
    $region29: #{_attention_forward.4} parent=5 // pred_check
      _
    $region30: #{_attention_forward.4} parent=5 // pred_check_branch
      %263 = sbr.rel (%p260) target = $region32
    $region31: #{_attention_forward.4} parent=5 // pred_region
      %s264 = ssub.s32 %s18, 1
      %s265 = smul.u32 2, %s31
      %p266 = scmp.lt.s32.totalorder %s29, 1
      %s267 = scalar_select %p266, %s29, 1
      %p268 = scmp.lt.s32.totalorder %s30, 1
      %s269 = scalar_select %p268, %s30, 1
      %p270 = scmp.lt.s32.totalorder %s265, 1
      %s271 = scalar_select %p270, %s265, 1
      %s272 = smul.addr %s269, 2
      %s273 = sadd.s32 %s271, %s272
      %s274 = smul.addr %s267, 4
      %s275 = sadd.s32 %s273, %s274
      %s276 = smul.addr %s275, 4
      %s277 = scalar_lea.vmem %s1, %s276
      %p278 = pneg %p74
      %p279 = pneg %p71
      %s280 = sld [smem:[#allocation7 + $0x1]]
      %p281 = scmp.lt.s32.totalorder %s32, %s280
      %s282 = scalar_select %p281, %s32, %s280
      %s283 = smul.u32 2, %s282
      %p284 = scmp.lt.s32.totalorder %s29, 1
      %s285 = scalar_select %p284, %s29, 1
      %p286 = scmp.lt.s32.totalorder %s30, 1
      %s287 = scalar_select %p286, %s30, 1
      %p288 = scmp.lt.s32.totalorder %s283, 1
      %s289 = scalar_select %p288, %s283, 1
      %s290 = smul.addr %s287, 2
      %s291 = sadd.s32 %s289, %s290
      %s292 = smul.addr %s285, 4
      %s293 = sadd.s32 %s291, %s292
      %s294 = smul.addr %s293, 4
      %s295 = scalar_lea.vmem %s2, %s294
      %p296 = pneg %p110
      %p297 = pneg %p107
      %s298 = sld [smem:[#allocation7 + $0x1]]
      %p299 = scmp.lt.s32.totalorder %s32, %s298
      %s300 = scalar_select %p299, %s32, %s298
      %s301 = smul.u32 2, %s300
      %p302 = scmp.lt.s32.totalorder %s29, 1
      %s303 = scalar_select %p302, %s29, 1
      %p304 = scmp.lt.s32.totalorder %s30, 1
      %s305 = scalar_select %p304, %s30, 1
      %p306 = scmp.lt.s32.totalorder %s301, 1
      %s307 = scalar_select %p306, %s301, 1
      %s308 = smul.addr %s305, 2
      %s309 = sadd.s32 %s307, %s308
      %s310 = smul.addr %s303, 4
      %s311 = sadd.s32 %s309, %s310
      %s312 = smul.addr %s311, 4
      %s313 = scalar_lea.vmem %s3, %s312
      %p314 = pneg %p146
      %p315 = pneg %p143
      %p316 = pneg %p176
      %p317 = pneg %p173
      %s318 = smul.u32 2, %s31
      %p319 = scmp.lt.s32.totalorder %s29, 1
      %s320 = scalar_select %p319, %s29, 1
      %p321 = scmp.lt.s32.totalorder %s30, 1
      %s322 = scalar_select %p321, %s30, 1
      %p323 = scmp.lt.s32.totalorder %s318, 1
      %s324 = scalar_select %p323, %s318, 1
      %s325 = smul.addr %s322, 2
      %s326 = sadd.s32 %s324, %s325
      %s327 = smul.addr %s320, 4
      %s328 = sadd.s32 %s326, %s327
      %s329 = smul.addr %s328, 4
      %s330 = scalar_lea.vmem %s4, %s329
      %s331 = smul.u32 2, %s31
      %p332 = scmp.lt.s32.totalorder %s29, 1
      %s333 = scalar_select %p332, %s29, 1
      %p334 = scmp.lt.s32.totalorder %s30, 1
      %s335 = scalar_select %p334, %s30, 1
      %p336 = scmp.lt.s32.totalorder %s331, 1
      %s337 = scalar_select %p336, %s331, 1
      %s338 = smul.addr %s335, 2
      %s339 = sadd.s32 %s337, %s338
      %s340 = smul.addr %s333, 4
      %s341 = sadd.s32 %s339, %s340
      %s342 = smul.addr %s341, 4
      %s343 = scalar_lea.vmem %s1, %s342
      %s344 = smul.u32 2, %s31
      %s345 = sld [smem:[#allocation7 + $0x1]]
      %p346 = scmp.lt.s32.totalorder %s32, %s345
      %s347 = scalar_select %p346, %s32, %s345
      %s348 = smul.u32 2, %s347
      %p349 = scmp.lt.s32.totalorder %s29, 1
      %s350 = scalar_select %p349, %s29, 1
      %p351 = scmp.lt.s32.totalorder %s30, 1
      %s352 = scalar_select %p351, %s30, 1
      %p353 = scmp.lt.s32.totalorder %s348, 1
      %s354 = scalar_select %p353, %s348, 1
      %s355 = smul.addr %s352, 2
      %s356 = sadd.s32 %s354, %s355
      %s357 = smul.addr %s350, 4
      %s358 = sadd.s32 %s356, %s357
      %s359 = smul.addr %s358, 4
      %s360 = scalar_lea.vmem %s2, %s359
      %s361 = sld [smem:[#allocation7 + $0x1]]
      %p362 = scmp.lt.s32.totalorder %s32, %s361
      %s363 = scalar_select %p362, %s32, %s361
      %s364 = smul.u32 2, %s363
      %s365 = sld [smem:[#allocation7 + $0x1]]
      %p366 = scmp.lt.s32.totalorder %s32, %s365
      %s367 = scalar_select %p366, %s32, %s365
      %s368 = smul.u32 2, %s367
      %p369 = scmp.lt.s32.totalorder %s29, 1
      %s370 = scalar_select %p369, %s29, 1
      %p371 = scmp.lt.s32.totalorder %s30, 1
      %s372 = scalar_select %p371, %s30, 1
      %p373 = scmp.lt.s32.totalorder %s368, 1
      %s374 = scalar_select %p373, %s368, 1
      %s375 = smul.addr %s372, 2
      %s376 = sadd.s32 %s374, %s375
      %s377 = smul.addr %s370, 4
      %s378 = sadd.s32 %s376, %s377
      %s379 = smul.addr %s378, 4
      %s380 = scalar_lea.vmem %s3, %s379
      %s381 = sld [smem:[#allocation7 + $0x1]]
      %p382 = scmp.lt.s32.totalorder %s32, %s381
      %s383 = scalar_select %p382, %s32, %s381
      %s384 = smul.u32 2, %s383
      %s385 = smul.u32 2, %s31
      %p386 = scmp.lt.s32.totalorder %s29, 1
      %s387 = scalar_select %p386, %s29, 1
      %p388 = scmp.lt.s32.totalorder %s30, 1
      %s389 = scalar_select %p388, %s30, 1
      %p390 = scmp.lt.s32.totalorder %s385, 1
      %s391 = scalar_select %p390, %s385, 1
      %s392 = smul.addr %s389, 2
      %s393 = sadd.s32 %s391, %s392
      %s394 = smul.addr %s387, 4
      %s395 = sadd.s32 %s393, %s394
      %s396 = smul.addr %s395, 4
      %s397 = scalar_lea.vmem %s4, %s396
      %s398 = smul.u32 2, %s31
      %s400 = sld [smem:[#allocation7]]
      %s401 = smul.u32 %s32, 16
      %p402 = scmp.eq.s32.totalorder %s32, 0
      // Predicated region
      $region33: #{_attention_forward.4} parent=31 // pred_check
        %p403 = pneg %p402
      $region34: #{_attention_forward.4} parent=31 // pred_check_branch
        %405 = sbr.rel (%p403) target = $region36
      $region35: #{_attention_forward.4} parent=31 // pred_region
        %v406 = vld [vmem:[%s343] sm:$0xf]
        %v407 = vld [vmem:[%s343 + $0x4] sm:$0xf]
        %v408 = vunpack.c.l.bf16 %v406
        %v409 = vunpack.c.l.bf16 %v407
        %v410 = vmul.f32 %v408, 0.35355338
        %v411 = vmul.f32 %v409, 0.35355338
        %v412 = vpack.c.bf16 %v410, %v410
        %v413 = vpack.c.bf16 %v411, %v411
        %vm414 = vcmask 60416
        %415 = vst.msk [vmem:[#allocation2] sm:$0xf] %vm414, %v412
        %416 = vst.msk [vmem:[#allocation2 + $0x4] sm:$0xf] %vm414, %v413
        %vm417 = vcmask 7168
        %418 = vst.msk [vmem:[#allocation3] sm:$0xff] %vm417, -inf
        %419 = vst.msk [vmem:[#allocation3 + $0x8] sm:$0xff] %vm417, -inf
        %420 = vst.msk [vmem:[#allocation4] sm:$0xff] %vm417, 0.0
        %421 = vst.msk [vmem:[#allocation4 + $0x8] sm:$0xff] %vm417, 0.0
        %vm422 = vcmask 64512
        %423 = vst.msk [vmem:[#allocation5] sm:$0xff] %vm422, 0.0
        %424 = vst.msk [vmem:[#allocation5 + $0x8] sm:$0xff] %vm422, 0.0
      $region36: #{_attention_forward.4} parent=31 // pred_fallthru
        _
      %p425 = scmp.lt.s32.totalorder %s401, %s400
      // Predicated region
      $region37: #{_attention_forward.4} parent=31 // pred_check
        %p426 = pneg %p425
      $region38: #{_attention_forward.4} parent=31 // pred_check_branch
        %428 = sbr.rel (%p426) target = $region40
      $region39: #{_attention_forward.4} parent=31 // pred_region
        %v429 = vld [vmem:[#allocation2] sm:$0xf]
        %v430 = vld [vmem:[#allocation2 + $0x4] sm:$0xf]
        %v431 = vld [vmem:[%s360] sm:$0xf]
        %v432 = vld [vmem:[%s360 + $0x4] sm:$0xf]
        %v433 = vld [vmem:[%s380] sm:$0xf]
        %v434 = vld [vmem:[%s380 + $0x4] sm:$0xf]
        %v437 = vunpack.c.l.b16 %v429
        %v438 = vunpack.c.l.b16 %v430
        %v439 = vpack.c.b16 %v438, %v437
        %v442 = vunpack.c.l.b16 %v431
        %v443 = vunpack.c.l.b16 %v432
        %v444 = vpack.c.b16 %v443, %v442
        %vm445 = vcmask 64512
        %v447 = vsel %vm445, %v439, 0
        %v450 = vsel %vm445, %v444, 0
        %452 = vmatpush.bf16.xpose.msra.mxu0 0
        %453 = vmatpush.bf16.xpose.msra.mxu0 0
        %454 = vmatpush.bf16.xpose.msra.mxu0 0
        %455 = vmatpush.bf16.xpose.msra.mxu0 0
        %456 = vmatpush.bf16.xpose.msra.mxu0 0
        %457 = vmatpush.bf16.xpose.msra.mxu0 0
        %458 = vmatpush.bf16.xpose.msra.mxu0 0
        %459 = vmatpush.bf16.xpose.msra.mxu0 %v450
        %460 = vmatmul.bf16.gmra.mxu0 %v447
        %v461 = vpop.f32.mrf.mxu0
        %v462 = vadd.f32 0.0, %v461
        %v463 = vpop.f32.mrf.mxu0
        %v464 = vadd.f32 0.0, %v463
        %465 = vdwg.mxu0
        %v466 = vlaneseq
        %v467 = vand.u32 %v466, 127
        %v468 = vstv %s401
        %v469 = vadd.s32 %v468, %v467
        %v470 = vstv %s400
        %vm471 = vcmp.lt.s32.totalorder %v469, %v470
        %v472 = vsel %vm471, %v462, -inf
        %v473 = vsel %vm471, %v464, -inf
        %v474 = vld [vmem:[#allocation3] sm:$0xff]
        %v475 = vld [vmem:[#allocation3 + $0x8] sm:$0xff]
        %vm476 = vcmask 130048
        %v477 = vsel %vm476, %v472, -inf
        %478 = vmax.xlane.f32.xlu0 %v477
        %v479 = vpop.xlane.xlu0 %478
        %v480 = vsel %vm476, %v473, -inf
        %481 = vmax.xlane.f32.xlu0 %v480
        %v482 = vpop.xlane.xlu0 %481
        %v483 = vmax.f32 %v474, %v479
        %v484 = vmax.f32 %v475, %v482
        %v485 = vsub.f32 %v474, %v483
        %v486 = vsub.f32 %v475, %v484
        %v487 = vmul.f32 %v485, 1.442695
        %v488 = vpow.pop %v487
        %v489 = vmul.f32 %v486, 1.442695
        %v490 = vpow.pop %v489
        %492 = vset.pattern.permute.xlu0 0
        %493 = vperm.xlu0 %492, %v483
        %v494 = vpop.permute.xlu0 %493
        %497 = vset.pattern.permute.xlu0 0
        %498 = vperm.xlu0 %497, %v484
        %v499 = vpop.permute.xlu0 %498
        %v501 = vsub.f32 %v472, %v494
        %v502 = vsub.f32 %v473, %v499
        %v503 = vmul.f32 %v501, 1.442695
        %v504 = vpow.pop %v503
        %v505 = vmul.f32 %v502, 1.442695
        %v506 = vpow.pop %v505
        %v507 = vld [vmem:[#allocation4] sm:$0xff]
        %v508 = vld [vmem:[#allocation4 + $0x8] sm:$0xff]
        %v509 = vmul.f32 %v488, %v507
        %v510 = vmul.f32 %v490, %v508
        %v511 = vsel %vm476, %v504, 0.0
        %512 = vadd.xlane.f32.xlu0 %v511
        %v513 = vpop.xlane.xlu0 %512
        %v514 = vsel %vm476, %v506, 0.0
        %515 = vadd.xlane.f32.xlu0 %v514
        %v516 = vpop.xlane.xlu0 %515
        %v517 = vadd.f32 %v509, %v513
        %v518 = vadd.f32 %v510, %v516
        %vm519 = vcmask 7168
        %520 = vst.msk [vmem:[#allocation4] sm:$0xff] %vm519, %v517
        %521 = vst.msk [vmem:[#allocation4 + $0x8] sm:$0xff] %vm519, %v518
        %v522 = vld [vmem:[#allocation5] sm:$0xff]
        %v523 = vld [vmem:[#allocation5 + $0x8] sm:$0xff]
        %525 = vset.pattern.permute.xlu0 0
        %526 = vperm.xlu0 %525, %v488
        %v527 = vpop.permute.xlu0 %526
        %530 = vset.pattern.permute.xlu0 0
        %531 = vperm.xlu0 %530, %v490
        %v532 = vpop.permute.xlu0 %531
        %v534 = vmul.f32 %v527, %v522
        %v535 = vmul.f32 %v532, %v523
        %v536 = vpack.c.bf16 %v506, %v504
        %v539 = vunpack.c.l.b16 %v433
        %v540 = vunpack.c.l.b16 %v434
        %v541 = vpack.c.b16 %v540, %v539
        %v544 = vsel %vm476, %v536, 0
        %546 = vmatpush.bf16.msra.mxu0 0
        %547 = vmatpush.bf16.msra.mxu0 0
        %548 = vmatpush.bf16.msra.mxu0 0
        %549 = vmatpush.bf16.msra.mxu0 0
        %550 = vmatpush.bf16.msra.mxu0 0
        %551 = vmatpush.bf16.msra.mxu0 0
        %552 = vmatpush.bf16.msra.mxu0 0
        %553 = vmatpush.bf16.msra.mxu0 %v541
        %554 = vmatmul.bf16.gmra.mxu0 %v544
        %v555 = vpop.f32.mrf.mxu0
        %v556 = vadd.f32 0.0, %v555
        %v557 = vpop.f32.mrf.mxu0
        %v558 = vadd.f32 0.0, %v557
        %559 = vdwg.mxu0
        %v560 = vadd.f32 %v534, %v556
        %v561 = vadd.f32 %v535, %v558
        %562 = vst.msk [vmem:[#allocation5] sm:$0xff] %vm445, %v560
        %563 = vst.msk [vmem:[#allocation5 + $0x8] sm:$0xff] %vm445, %v561
        %564 = vst.msk [vmem:[#allocation3] sm:$0xff] %vm519, %v483
        %565 = vst.msk [vmem:[#allocation3 + $0x8] sm:$0xff] %vm519, %v484
      $region40: #{_attention_forward.4} parent=31 // pred_fallthru
        _
      // Predicated region
      $region41: #{_attention_forward.4} parent=31 // pred_check
        %p566 = pneg %p402
      $region42: #{_attention_forward.4} parent=31 // pred_check_branch
        %568 = sbr.rel (%p566) target = $region44
      $region43: #{_attention_forward.4} parent=31 // pred_region
        %v569 = vld [vmem:[#allocation4] sm:$0xff]
        %v570 = vld [vmem:[#allocation4 + $0x8] sm:$0xff]
        %v571 = vrcp.pop %v569
        %v572 = vrcp.pop %v570
        %v573 = vld [vmem:[#allocation5] sm:$0xff]
        %v574 = vld [vmem:[#allocation5 + $0x8] sm:$0xff]
        %576 = vset.pattern.permute.xlu0 0
        %577 = vperm.xlu0 %576, %v571
        %v578 = vpop.permute.xlu0 %577
        %581 = vset.pattern.permute.xlu0 0
        %582 = vperm.xlu0 %581, %v572
        %v583 = vpop.permute.xlu0 %582
        %v585 = vmul.f32 %v573, %v578
        %v586 = vmul.f32 %v574, %v583
        %v587 = vpack.c.bf16 %v585, %v585
        %v588 = vpack.c.bf16 %v586, %v586
        %vm589 = vcmask 60416
        %590 = vst.msk [vmem:[%s397] sm:$0xf] %vm589, %v587
        %591 = vst.msk [vmem:[%s397 + $0x4] sm:$0xf] %vm589, %v588
      $region44: #{_attention_forward.4} parent=31 // pred_fallthru
        _
      %s592 = smul.u32 2, %s31
      %p593 = scmp.lt.s32.totalorder %s29, 1
      %s594 = scalar_select %p593, %s29, 1
      %p595 = scmp.lt.s32.totalorder %s30, 1
      %s596 = scalar_select %p595, %s30, 1
      %p597 = scmp.lt.s32.totalorder %s592, 1
      %s598 = scalar_select %p597, %s592, 1
      %s599 = smul.addr %s596, 2
      %s600 = sadd.s32 %s598, %s599
      %s601 = smul.addr %s594, 4
      %s602 = sadd.s32 %s600, %s601
      %s603 = smul.addr %s602, 4
      %s604 = scalar_lea.vmem %s4, %s603
      // Predicated region
      $region45: #{_attention_forward.4} parent=31 // pred_check
        %p605 = pneg %p173
      $region46: #{_attention_forward.4} parent=31 // pred_check_branch
        %607 = sbr.rel (%p605) target = $region48
      $region47: #{_attention_forward.4} parent=31 // pred_region
        %s608 = smul.u32 2, %s31
      $region48: #{_attention_forward.4} parent=31 // pred_fallthru
        _
    $region32: #{_attention_forward.4} parent=5 // pred_fallthru
      _
    %p609 = scmp.le.s32.totalorder 2, %s18
    // Predicated region
    $region49: #{_attention_forward.4} parent=5 // pred_check
      %p610 = pneg %p609
    $region50: #{_attention_forward.4} parent=5 // pred_check_branch
      %612 = sbr.rel (%p610) target = $region52
    $region51: #{_attention_forward.4} parent=5 // pred_region
      %s613 = ssub.s32 %s18, 2
      // Predicated region
      $region53: #{_attention_forward.4} parent=51 // pred_check
        %p614 = pneg %p179
      $region54: #{_attention_forward.4} parent=51 // pred_check_branch
        %616 = sbr.rel (%p614) target = $region56
      $region55: #{_attention_forward.4} parent=51 // pred_region
        %s617 = smul.u32 2, %s35
        %p618 = scmp.lt.s32.totalorder %s33, 1
        %s619 = scalar_select %p618, %s33, 1
        %p620 = scmp.lt.s32.totalorder %s34, 1
        %s621 = scalar_select %p620, %s34, 1
        %p622 = scmp.lt.s32.totalorder %s617, 1
        %s623 = scalar_select %p622, %s617, 1
        %s624 = smul.addr %s621, 2
        %s625 = sadd.s32 %s623, %s624
        %s626 = smul.addr %s619, 4
        %s627 = sadd.s32 %s625, %s626
        %s628 = smul.addr %s627, 4
        %s629 = scalar_lea.vmem %s4, %s628
      $region56: #{_attention_forward.4} parent=51 // pred_fallthru
        _
    $region52: #{_attention_forward.4} parent=5 // pred_fallthru
      _
  $region6: #{_attention_forward.4} parent=0 // loop_footer
    %s22 = sadd.s32 1, %s18
  $region7: #{_attention_forward.4} parent=0 // loop_footer_branch
    %17 = sbr.rel target = $region3
  $region8: #{_attention_forward.4} parent=0 // loop_exit
    _

</llo_original>
